<compile_context>
chip_gen: v7x
topology: tpu7x:2x2x1
jax: 0.10.0
libtpu: 0.0.40
codegen_flags: <defaults>
</compile_context>

<pallas_src>
import jax
import jax.numpy as jnp
from jax import lax
from jax.experimental import pallas as pl
from jax.experimental.pallas import tpu as pltpu


def _round_up(x, m):
    return ((x + m - 1) // m) * m


def hybrid_embed_kernel(patch_ref, wc_ref, bc_ref, wp_ref, bp_ref, out_ref):
    # Backbone stage: patchify-conv as matmul (bf16 operands, f32 accumulate),
    # then bias + ReLU in f32.
    feat = jnp.dot(patch_ref[...], wc_ref[...],
                   preferred_element_type=jnp.float32)
    feat = jnp.maximum(feat + bc_ref[...], 0.0)
    # HybridEmbed.proj: Linear(feature_dim, embed_dim).  Cast the intermediate
    # to bf16 (halves vreg pressure between the two dots, bf16 MXU path);
    # accumulate in f32, bias add in f32.
    out = jnp.dot(feat.astype(jnp.bfloat16), wp_ref[...],
                  preferred_element_type=jnp.float32)
    out_ref[...] = (out + bp_ref[...]).astype(out_ref.dtype)


def hybrid_embed(x, conv_w, conv_b, proj_w, proj_b, *, patch, tm_target=256,
                 vmem_budget=64 * 1024 * 1024):
    """x: (B, C, H, W) NCHW.  conv_w: (feat, C, P, P), proj_w: (embed, feat)
    (PyTorch nn.Linear layout).  Returns (B, N, embed)."""
    B, C, H, W = x.shape
    P = patch
    Hp, Wp = H // P, W // P
    N = Hp * Wp
    feat_dim = conv_w.shape[0]
    embed_dim = proj_w.shape[0]

    M = B * N
    K1 = C * P * P

    # Lane-dense padding: all lane (last) dims to multiples of 128.
    K1p = _round_up(K1, 128)
    Fp = _round_up(feat_dim, 128)
    Ep = _round_up(embed_dim, 128)

    # Row tile: large for real workloads, 8-aligned clamp for tiny M, and
    # shrunk if the resident weights + double-buffered row tiles would not fit
    # the VMEM budget.
    tm = tm_target if M >= tm_target else _round_up(M, 8)
    resident = 2 * (K1p * Fp + Fp * Ep) + 4 * (Fp + Ep)      # weights + biases
    while tm > 8:
        per_row = 2 * 2 * K1p + 2 * 4 * Ep + 4 * (Fp + Ep)   # dbl-buf in/out + scratch rows
        if resident + tm * per_row <= vmem_budget:
            break
        tm //= 2
    tm = max(tm, 8)
    Mp = _round_up(M, tm)

    # ---- glue: im2col (non-overlapping patches, NCHW order inside a patch).
    # Row index = (b, h', w') row-major == flatten(2).transpose(1, 2).
    # With allow_input_fusion this reshape/transpose/pad chain fuses into the
    # pallas_call input DMA (no HBM materialization of the im2col matrix).
    patches = x.reshape(B, C, Hp, P, Wp, P)
    patches = patches.transpose(0, 2, 4, 1, 3, 5)            # (B, Hp, Wp, C, P, P)
    patches = patches.reshape(M, K1)
    patches = jnp.pad(patches, ((0, Mp - M), (0, K1p - K1))).astype(jnp.bfloat16)

    wc = conv_w.reshape(feat_dim, K1).T                       # (K1, feat)
    wc = jnp.pad(wc, ((0, K1p - K1), (0, Fp - feat_dim))).astype(jnp.bfloat16)
    bc = jnp.pad(conv_b.astype(jnp.float32), (0, Fp - feat_dim)).reshape(1, Fp)
    wp = jnp.pad(proj_w.T.astype(jnp.float32),
                 ((0, Fp - feat_dim), (0, Ep - embed_dim))).astype(jnp.bfloat16)
    bp = jnp.pad(proj_b.astype(jnp.float32), (0, Ep - embed_dim)).reshape(1, Ep)

    flops = 2 * Mp * K1p * Fp + 2 * Mp * Fp * Ep
    bytes_accessed = (patches.size * 2 + wc.size * 2 + wp.size * 2
                      + bc.size * 4 + bp.size * 4 + Mp * Ep * x.dtype.itemsize)

    # NOTE: for very large K1 (real backbones) a K-reduction grid axis with a
    # VMEM accumulator would replace the single full-K wc block; not needed at
    # these sizes.
    out = pl.pallas_call(
        hybrid_embed_kernel,
        out_shape=jax.ShapeDtypeStruct((Mp, Ep), x.dtype),
        grid_spec=pltpu.PrefetchScalarGridSpec(
            num_scalar_prefetch=0,
            grid=(Mp // tm,),
            in_specs=[
                pl.BlockSpec((tm, K1p), lambda i: (i, 0)),
                pl.BlockSpec((K1p, Fp), lambda i: (0, 0)),
                pl.BlockSpec((1, Fp), lambda i: (0, 0)),
                pl.BlockSpec((Fp, Ep), lambda i: (0, 0)),
                pl.BlockSpec((1, Ep), lambda i: (0, 0)),
            ],
            out_specs=pl.BlockSpec((tm, Ep), lambda i: (i, 0)),
        ),
        compiler_params=pltpu.CompilerParams(
            dimension_semantics=("parallel",),
            allow_input_fusion=[True, True, True, True, True],
            vmem_limit_bytes=vmem_budget,
        ),
        cost_estimate=pl.CostEstimate(
            flops=flops, transcendentals=0, bytes_accessed=bytes_accessed),
    )(patches, wc, bc, wp, bp)

    return out[:M, :embed_dim].reshape(B, N, embed_dim)


def reference(x, conv_w, conv_b, proj_w, proj_b, *, patch):
    # Independent f32 reference: real conv (NCHW) + flatten(2).transpose(1,2) + Linear.
    feat = lax.conv_general_dilated(
        x, conv_w, window_strides=(patch, patch), padding="VALID",
        dimension_numbers=("NCHW", "OIHW", "NCHW"))
    feat = feat + conv_b.reshape(1, -1, 1, 1)
    feat = jnp.maximum(feat, 0.0)                            # synthetic backbone ReLU
    B, Cf, Hp, Wp = feat.shape
    tok = feat.reshape(B, Cf, Hp * Wp).transpose(0, 2, 1)    # flatten(2).transpose(1,2)
    return tok @ proj_w.T + proj_b                           # nn.Linear


if __name__ == "__main__":
    # Small shapes consistent with the module: img 16x16, in_chans 4,
    # backbone stride/patch 4 -> feature map 4x4 (N=16), feature_dim 32, embed_dim 64.
    B, C, H, W = 2, 4, 16, 16
    PATCH = 4
    FEAT, EMBED = 32, 64

    key = jax.random.PRNGKey(0)
    kx, kcw, kcb, kpw, kpb = jax.random.split(key, 5)
    x = jax.random.normal(kx, (B, C, H, W), dtype=jnp.float32)
    conv_w = jax.random.normal(kcw, (FEAT, C, PATCH, PATCH), dtype=jnp.float32) * 0.05
    conv_b = jax.random.normal(kcb, (FEAT,), dtype=jnp.float32) * 0.01
    proj_w = jax.random.normal(kpw, (EMBED, FEAT), dtype=jnp.float32) * 0.05
    proj_b = jax.random.normal(kpb, (EMBED,), dtype=jnp.float32) * 0.01

    # TODO(synk): arbitrary user-supplied backbones are not expressible; a
    # deterministic patchify-conv + ReLU backbone is used instead.
    out = hybrid_embed(x, conv_w, conv_b, proj_w, proj_b, patch=PATCH)
    out = jax.block_until_ready(out)

    ref = reference(x, conv_w, conv_b, proj_w, proj_b, patch=PATCH)
    assert out.shape == (B, (H // PATCH) * (W // PATCH), EMBED)
    # bf16 MXU operands -> loosened tolerance vs. the f32 reference.
    assert jnp.allclose(out, ref, atol=5e-2, rtol=5e-2), float(jnp.max(jnp.abs(out - ref)))

    print("KERNEL_OK")
</pallas_src>

<mosaic_0001>
module attributes {stable_mosaic.version = 11 : i64} {
  func.func @hybrid_embed_kernel(%arg0: i32, %arg1: memref<32x128xbf16, #tpu.memory_space<vmem>>, %arg2: memref<128x128xbf16, #tpu.memory_space<vmem>>, %arg3: memref<1x128xf32, #tpu.memory_space<vmem>>, %arg4: memref<128x128xbf16, #tpu.memory_space<vmem>>, %arg5: memref<1x128xf32, #tpu.memory_space<vmem>>, %arg6: memref<32x128xf32, #tpu.memory_space<vmem>>) attributes {dimension_semantics = [#tpu.dimension_semantics<parallel>], iteration_bounds = array<i64: 1>, scalar_prefetch = 0 : i64, scratch_operands = 0 : i64, tpu.core_type = #tpu.core_type<tc>, window_params = [{transform_indices = @transform_0, window_bounds = array<i64: 32, 128>}, {pipeline_mode = #tpu.pipeline_mode<synchronous>, transform_indices = @transform_1, window_bounds = array<i64: 128, 128>}, {pipeline_mode = #tpu.pipeline_mode<synchronous>, transform_indices = @transform_2, window_bounds = array<i64: 1, 128>}, {pipeline_mode = #tpu.pipeline_mode<synchronous>, transform_indices = @transform_3, window_bounds = array<i64: 128, 128>}, {pipeline_mode = #tpu.pipeline_mode<synchronous>, transform_indices = @transform_4, window_bounds = array<i64: 1, 128>}, {transform_indices = @transform_5, window_bounds = array<i64: 32, 128>}]} {
    %c0 = arith.constant 0 : index
    %c0_0 = arith.constant 0 : index
    %0 = vector.load %arg1[%c0, %c0_0] : memref<32x128xbf16, #tpu.memory_space<vmem>>, vector<32x128xbf16>
    %c0_1 = arith.constant 0 : index
    %c0_2 = arith.constant 0 : index
    %1 = vector.load %arg2[%c0_1, %c0_2] : memref<128x128xbf16, #tpu.memory_space<vmem>>, vector<128x128xbf16>
    %cst = arith.constant dense<0.000000e+00> : vector<32x128xf32>
    %2 = tpu.matmul %0, %1, %cst {dimension_numbers = #tpu.dot_dimension_numbers<[1], [0], [0], [1], [0, 0, 1, 1], [], []>} : vector<32x128xbf16>, vector<128x128xbf16>, vector<32x128xf32> -> vector<32x128xf32>
    %c0_3 = arith.constant 0 : index
    %c0_4 = arith.constant 0 : index
    %3 = vector.load %arg3[%c0_3, %c0_4] : memref<1x128xf32, #tpu.memory_space<vmem>>, vector<1x128xf32>
    %4 = vector.broadcast %3 : vector<1x128xf32> to vector<32x128xf32>
    %5 = arith.addf %2, %4 : vector<32x128xf32>
    %cst_5 = arith.constant 0.000000e+00 : f32
    %6 = vector.broadcast %cst_5 : f32 to vector<32x128xf32>
    %7 = arith.maximumf %5, %6 : vector<32x128xf32>
    %8 = arith.truncf %7 : vector<32x128xf32> to vector<32x128xbf16>
    %c0_6 = arith.constant 0 : index
    %c0_7 = arith.constant 0 : index
    %9 = vector.load %arg4[%c0_6, %c0_7] : memref<128x128xbf16, #tpu.memory_space<vmem>>, vector<128x128xbf16>
    %cst_8 = arith.constant dense<0.000000e+00> : vector<32x128xf32>
    %10 = tpu.matmul %8, %9, %cst_8 {dimension_numbers = #tpu.dot_dimension_numbers<[1], [0], [0], [1], [0, 0, 1, 1], [], []>} : vector<32x128xbf16>, vector<128x128xbf16>, vector<32x128xf32> -> vector<32x128xf32>
    %c0_9 = arith.constant 0 : index
    %c0_10 = arith.constant 0 : index
    %11 = vector.load %arg5[%c0_9, %c0_10] : memref<1x128xf32, #tpu.memory_space<vmem>>, vector<1x128xf32>
    %12 = vector.broadcast %11 : vector<1x128xf32> to vector<32x128xf32>
    %13 = arith.addf %10, %12 : vector<32x128xf32>
    %c0_11 = arith.constant 0 : index
    %c0_12 = arith.constant 0 : index
    %14 = vector.load %arg6[%c0_11, %c0_12] : memref<32x128xf32, #tpu.memory_space<vmem>>, vector<32x128xf32>
    tpu.vector_store %arg6[%c0_11, %c0_12], %13 {strides = array<i32>} : memref<32x128xf32, #tpu.memory_space<vmem>>, vector<32x128xf32>,
    return
  }
  func.func @transform_0(%arg0: i32) -> (i32, i32) {
    %c0_i32 = arith.constant 0 : i32
    %c0_i32_0 = arith.constant 0 : i32
    return %arg0, %c0_i32 : i32, i32
  }
  func.func @transform_1(%arg0: i32) -> (i32, i32) {
    %c0_i32 = arith.constant 0 : i32
    %c0_i32_0 = arith.constant 0 : i32
    %c0_i32_1 = arith.constant 0 : i32
    return %c0_i32, %c0_i32_0 : i32, i32
  }
  func.func @transform_2(%arg0: i32) -> (i32, i32) {
    %c0_i32 = arith.constant 0 : i32
    %c0_i32_0 = arith.constant 0 : i32
    %c0_i32_1 = arith.constant 0 : i32
    return %c0_i32, %c0_i32_0 : i32, i32
  }
  func.func @transform_3(%arg0: i32) -> (i32, i32) {
    %c0_i32 = arith.constant 0 : i32
    %c0_i32_0 = arith.constant 0 : i32
    %c0_i32_1 = arith.constant 0 : i32
    return %c0_i32, %c0_i32_0 : i32, i32
  }
  func.func @transform_4(%arg0: i32) -> (i32, i32) {
    %c0_i32 = arith.constant 0 : i32
    %c0_i32_0 = arith.constant 0 : i32
    %c0_i32_1 = arith.constant 0 : i32
    return %c0_i32, %c0_i32_0 : i32, i32
  }
  func.func @transform_5(%arg0: i32) -> (i32, i32) {
    %c0_i32 = arith.constant 0 : i32
    %c0_i32_0 = arith.constant 0 : i32
    return %arg0, %c0_i32 : i32, i32
  }
}

</mosaic_0001>

<llo_original>
// kernel: tpu_custom_call.1
$region0: #{tpu_custom_call.1}
  #allocation0 [shape = 'u32[]', space=smem, size = 0x4, offset = 0x4, fixed_abs, tag = 'smem constant byte address 0x4 - core index']
  #allocation1 [shape = 'u32[144,128]{1,0:T(1,128)}', space=vmem, size = 0x12000, scoped, tag = 'internal scratch']
  %s0 = inlined_call_operand.hbm [shape: bf16[32,128], index: 0, kind: input, shape index: {}]
  %s1 = inlined_call_operand.hbm [shape: bf16[128,128], index: 1, kind: input, shape index: {}]
  %s2 = inlined_call_operand.hbm [shape: f32[1,128], index: 2, kind: input, shape index: {}]
  %s3 = inlined_call_operand.hbm [shape: bf16[128,128], index: 3, kind: input, shape index: {}]
  %s4 = inlined_call_operand.hbm [shape: f32[1,128], index: 4, kind: input, shape index: {}]
  %s5 = inlined_call_operand.hbm [shape: f32[32,128], index: 5, kind: output, shape index: {}]
  %s6 = sld [smem:[#allocation0]]
  $region50: #{tpu_custom_call.1} parent=0
    _
  %s8 = ssub.s32 1, %s6
  %s9 = scalar_select 0, %s8, %s6
  $region1: #{tpu_custom_call.1} parent=0
    #allocation2 [shape = 'u8[8192]{0}', space=vmem, size = 0x2000, scoped, tag = 'input window, operand 0, single buffered']
    #allocation3 [shape = 's32[1]{0}', space=sflag, size = 0x4, scoped, tag = 'scoped memory for tpu_custom_call.1']
    #allocation4 [shape = 's32[1]{0}', space=sflag, size = 0x4, scoped, tag = 'scoped memory for tpu_custom_call.1']
    #allocation5 [shape = 'u8[32768]{0}', space=vmem, size = 0x8000, scoped, tag = 'input window, operand 1, single buffered']
    #allocation6 [shape = 's32[1]{0}', space=sflag, size = 0x4, scoped, tag = 'scoped memory for tpu_custom_call.1']
    #allocation7 [shape = 'u8[512]{0}', space=vmem, size = 0x400, scoped, tag = 'input window, operand 2, single buffered']
    #allocation8 [shape = 'u8[32768]{0}', space=vmem, size = 0x8000, scoped, tag = 'input window, operand 3, single buffered']
    #allocation9 [shape = 's32[1]{0}', space=sflag, size = 0x4, scoped, tag = 'scoped memory for tpu_custom_call.1']
    #allocation10 [shape = 'u8[512]{0}', space=vmem, size = 0x400, scoped, tag = 'input window, operand 4, single buffered']
    #allocation11 [shape = 'u8[16384]{0}', space=vmem, size = 0x4000, scoped, tag = 'output window, operand 0, single buffered']
    %10 = vsyncpa [#allocation3], 0
    %11 = vsyncpa [#allocation6], 0
    %12 = vsyncpa [#allocation9], 0
    %13 = vsyncpa [#allocation4], 0
    // Predicated region
    $region2: #{tpu_custom_call.1} parent=1 // pred_check
      _
    $region3: #{tpu_custom_call.1} parent=1 // pred_check_branch
      %15 = sbr.rel (0) target = $region5
    $region4: #{tpu_custom_call.1} parent=1 // pred_region
      %s17 = ssub.s32 256, 256
      %18 = vsyncadd [#allocation3], %s17
      %s19 = sshll.u32 [#allocation2], 4
      %s20 = int_to_ptr.vmem [resolvable:$true] %s19
      %25 = dma.hbm_to_vmem [thread:$0]  %s0, 256, %s20, [#allocation3], 64, 64, 4
    $region5: #{tpu_custom_call.1} parent=1 // pred_fallthru
      _
    // Predicated region
    $region6: #{tpu_custom_call.1} parent=1 // pred_check
      _
    $region7: #{tpu_custom_call.1} parent=1 // pred_check_branch
      %27 = sbr.rel (0) target = $region9
    $region8: #{tpu_custom_call.1} parent=1 // pred_region
      %s29 = ssub.s32 1024, 1024
      %30 = vsyncadd [#allocation6], %s29
      %s31 = sshll.u32 [#allocation5], 4
      %s32 = int_to_ptr.vmem [resolvable:$true] %s31
      %37 = dma.hbm_to_vmem [thread:$0]  %s1, 1024, %s32, [#allocation6], 64, 64, 4
    $region9: #{tpu_custom_call.1} parent=1 // pred_fallthru
      _
    // Predicated region
    $region10: #{tpu_custom_call.1} parent=1 // pred_check
      _
    $region11: #{tpu_custom_call.1} parent=1 // pred_check_branch
      %39 = sbr.rel (0) target = $region13
    $region12: #{tpu_custom_call.1} parent=1 // pred_region
      %s41 = ssub.s32 16, 16
      %42 = vsyncadd [#allocation6], %s41
      %s44 = sshll.u32 [#allocation7], 4
      %s45 = int_to_ptr.vmem [resolvable:$true] %s44
      %47 = dma.hbm_to_vmem [thread:$0]  %s2, 16, %s45, [#allocation6]
    $region13: #{tpu_custom_call.1} parent=1 // pred_fallthru
      _
    // Predicated region
    $region14: #{tpu_custom_call.1} parent=1 // pred_check
      _
    $region15: #{tpu_custom_call.1} parent=1 // pred_check_branch
      %49 = sbr.rel (0) target = $region17
    $region16: #{tpu_custom_call.1} parent=1 // pred_region
      %s51 = ssub.s32 1024, 1024
      %52 = vsyncadd [#allocation9], %s51
      %s53 = sshll.u32 [#allocation8], 4
      %s54 = int_to_ptr.vmem [resolvable:$true] %s53
      %59 = dma.hbm_to_vmem [thread:$0]  %s3, 1024, %s54, [#allocation9], 64, 64, 4
    $region17: #{tpu_custom_call.1} parent=1 // pred_fallthru
      _
    // Predicated region
    $region18: #{tpu_custom_call.1} parent=1 // pred_check
      _
    $region19: #{tpu_custom_call.1} parent=1 // pred_check_branch
      %61 = sbr.rel (0) target = $region21
    $region20: #{tpu_custom_call.1} parent=1 // pred_region
      %s63 = ssub.s32 16, 16
      %64 = vsyncadd [#allocation9], %s63
      %s66 = sshll.u32 [#allocation10], 4
      %s67 = int_to_ptr.vmem [resolvable:$true] %s66
      %69 = dma.hbm_to_vmem [thread:$0]  %s4, 16, %s67, [#allocation9]
    $region21: #{tpu_custom_call.1} parent=1 // pred_fallthru
      _
    // Predicated region
    $region22: #{tpu_custom_call.1} parent=1 // pred_check
      _
    $region23: #{tpu_custom_call.1} parent=1 // pred_check_branch
      %71 = sbr.rel (0) target = $region25
    $region24: #{tpu_custom_call.1} parent=1 // pred_region
      %72 = dma.done [#allocation3], 256
    $region25: #{tpu_custom_call.1} parent=1 // pred_fallthru
      _
    // Predicated region
    $region26: #{tpu_custom_call.1} parent=1 // pred_check
      _
    $region27: #{tpu_custom_call.1} parent=1 // pred_check_branch
      %74 = sbr.rel (0) target = $region29
    $region28: #{tpu_custom_call.1} parent=1 // pred_region
      %75 = dma.done [#allocation6], 1024
    $region29: #{tpu_custom_call.1} parent=1 // pred_fallthru
      _
    // Predicated region
    $region30: #{tpu_custom_call.1} parent=1 // pred_check
      _
    $region31: #{tpu_custom_call.1} parent=1 // pred_check_branch
      %77 = sbr.rel (0) target = $region33
    $region32: #{tpu_custom_call.1} parent=1 // pred_region
      %78 = dma.done [#allocation6], 16
    $region33: #{tpu_custom_call.1} parent=1 // pred_fallthru
      _
    // Predicated region
    $region34: #{tpu_custom_call.1} parent=1 // pred_check
      _
    $region35: #{tpu_custom_call.1} parent=1 // pred_check_branch
      %80 = sbr.rel (0) target = $region37
    $region36: #{tpu_custom_call.1} parent=1 // pred_region
      %81 = dma.done [#allocation9], 1024
    $region37: #{tpu_custom_call.1} parent=1 // pred_fallthru
      _
    // Predicated region
    $region38: #{tpu_custom_call.1} parent=1 // pred_check
      _
    $region39: #{tpu_custom_call.1} parent=1 // pred_check_branch
      %83 = sbr.rel (0) target = $region41
    $region40: #{tpu_custom_call.1} parent=1 // pred_region
      %84 = dma.done [#allocation9], 16
    $region41: #{tpu_custom_call.1} parent=1 // pred_fallthru
      _
    %v86 = vld [vmem:[#allocation2] sm:$0xf]
    %v87 = vld [vmem:[#allocation2 + $0x4] sm:$0xf]
    %v88 = vld [vmem:[#allocation2 + $0x8] sm:$0xf]
    %v89 = vld [vmem:[#allocation2 + $0xc] sm:$0xf]
    %v90 = vld [vmem:[#allocation5] sm:$0xf]
    %v91 = vld [vmem:[#allocation5 + $0x4] sm:$0xf]
    %v92 = vld [vmem:[#allocation5 + $0x8] sm:$0xf]
    %v93 = vld [vmem:[#allocation5 + $0xc] sm:$0xf]
    %v94 = vld [vmem:[#allocation5 + $0x10] sm:$0xf]
    %v95 = vld [vmem:[#allocation5 + $0x14] sm:$0xf]
    %v96 = vld [vmem:[#allocation5 + $0x18] sm:$0xf]
    %v97 = vld [vmem:[#allocation5 + $0x1c] sm:$0xf]
    %v98 = vld [vmem:[#allocation5 + $0x20] sm:$0xf]
    %v99 = vld [vmem:[#allocation5 + $0x24] sm:$0xf]
    %v100 = vld [vmem:[#allocation5 + $0x28] sm:$0xf]
    %v101 = vld [vmem:[#allocation5 + $0x2c] sm:$0xf]
    %v102 = vld [vmem:[#allocation5 + $0x30] sm:$0xf]
    %v103 = vld [vmem:[#allocation5 + $0x34] sm:$0xf]
    %v104 = vld [vmem:[#allocation5 + $0x38] sm:$0xf]
    %v105 = vld [vmem:[#allocation5 + $0x3c] sm:$0xf]
    %v106 = vld [vmem:[#allocation7] sm:$0x1]
    %v108 = vlaneseq
    %v109 = vshrl.u32 %v108, 7
    %v110 = vsub.s32 0, %v109
    %v111 = vrot.slane %v106, %v110
    %v117 = vunpack.c.l.b16 %v86
    %v118 = vunpack.c.l.b16 %v87
    %v119 = vunpack.c.l.b16 %v88
    %v120 = vunpack.c.l.b16 %v89
    %v121 = vpack.c.b16 %v118, %v117
    %v122 = vpack.c.b16 %v120, %v119
    %v141 = vunpack.c.l.b16 %v90
    %v142 = vunpack.c.l.b16 %v91
    %v143 = vunpack.c.l.b16 %v92
    %v144 = vunpack.c.l.b16 %v93
    %v145 = vunpack.c.l.b16 %v94
    %v146 = vunpack.c.l.b16 %v95
    %v147 = vunpack.c.l.b16 %v96
    %v148 = vunpack.c.l.b16 %v97
    %v149 = vunpack.c.l.b16 %v98
    %v150 = vunpack.c.l.b16 %v99
    %v151 = vunpack.c.l.b16 %v100
    %v152 = vunpack.c.l.b16 %v101
    %v153 = vunpack.c.l.b16 %v102
    %v154 = vunpack.c.l.b16 %v103
    %v155 = vunpack.c.l.b16 %v104
    %v156 = vunpack.c.l.b16 %v105
    %v157 = vpack.c.b16 %v142, %v141
    %v158 = vpack.c.b16 %v144, %v143
    %v159 = vpack.c.b16 %v146, %v145
    %v160 = vpack.c.b16 %v148, %v147
    %v161 = vpack.c.b16 %v150, %v149
    %v162 = vpack.c.b16 %v152, %v151
    %v163 = vpack.c.b16 %v154, %v153
    %v164 = vpack.c.b16 %v156, %v155
    %173 = vmatprep.subr.bf16.mxu0 0
    %174 = vmatpush1.bf16.msra.mxu0 %v157
    %175 = vmatprep.subr.bf16.mxu0 0
    %176 = vmatpush1.bf16.msra.mxu0 %v158
    %177 = vmatprep.subr.bf16.mxu0 0
    %178 = vmatpush1.bf16.msra.mxu0 %v159
    %179 = vmatprep.subr.bf16.mxu0 0
    %180 = vmatpush1.bf16.msra.mxu0 %v160
    %181 = vmatprep.subr.bf16.mxu0 0
    %182 = vmatpush1.bf16.msra.mxu0 %v161
    %183 = vmatprep.subr.bf16.mxu0 0
    %184 = vmatpush1.bf16.msra.mxu0 %v162
    %185 = vmatprep.subr.bf16.mxu0 0
    %186 = vmatpush1.bf16.msra.mxu0 %v163
    %187 = vmatprep.subr.bf16.mxu0 0
    %188 = vmatpush1.bf16.msra.mxu0 %v164
    %189 = vmatprep.subr.bf16.mxu0 0
    %190 = vmatpush1.bf16.msra.mxu0 0
    %191 = vmatprep.subr.bf16.mxu0 0
    %192 = vmatpush1.bf16.msra.mxu0 0
    %193 = vmatprep.subr.bf16.mxu0 0
    %194 = vmatpush1.bf16.msra.mxu0 0
    %195 = vmatprep.subr.bf16.mxu0 0
    %196 = vmatpush1.bf16.msra.mxu0 0
    %197 = vmatprep.subr.bf16.mxu0 0
    %198 = vmatpush1.bf16.msra.mxu0 0
    %199 = vmatprep.subr.bf16.mxu0 0
    %200 = vmatpush1.bf16.msra.mxu0 0
    %201 = vmatprep.subr.bf16.mxu0 0
    %202 = vmatpush1.bf16.msra.mxu0 0
    %203 = vmatprep.subr.bf16.mxu0 0
    %204 = vmatpush1.bf16.msra.mxu0 0
    %205 = vmatprep.mubr.bf16.mxu0 0
    %206 = vmatmul.mubr.bf16.gmra.mrb[0].mxu0 %v121
    %v207 = vpop.f32.mrb[0].mxu0
    %v208 = vadd.f32 %v111, %v207
    %v209 = vpop.f32.mrb[0].mxu0
    %v210 = vpop.f32.mrb[0].mxu0
    %v211 = vadd.f32 %v111, %v210
    %v212 = vpop.f32.mrb[0].mxu0
    %213 = vmatprep.mubr.bf16.mxu0 0
    %214 = vmatmul.mubr.bf16.gmra.mrb[0].mxu0 %v122
    %v215 = vpop.f32.mrb[0].mxu0
    %v216 = vadd.f32 %v111, %v215
    %v217 = vpop.f32.mrb[0].mxu0
    %v218 = vpop.f32.mrb[0].mxu0
    %v219 = vadd.f32 %v111, %v218
    %v220 = vpop.f32.mrb[0].mxu0
    %221 = vdwg.mxu0
    %v222 = vmax.f32 %v208, 0.0
    %v223 = vmax.f32 %v211, 0.0
    %v224 = vmax.f32 %v216, 0.0
    %v225 = vmax.f32 %v219, 0.0
    %v226 = vpack.c.bf16 %v223, %v222
    %v227 = vpack.c.bf16 %v225, %v224
    %v228 = vld [vmem:[#allocation8] sm:$0xf]
    %v229 = vld [vmem:[#allocation8 + $0x4] sm:$0xf]
    %v230 = vld [vmem:[#allocation8 + $0x8] sm:$0xf]
    %v231 = vld [vmem:[#allocation8 + $0xc] sm:$0xf]
    %v232 = vld [vmem:[#allocation8 + $0x10] sm:$0xf]
    %v233 = vld [vmem:[#allocation8 + $0x14] sm:$0xf]
    %v234 = vld [vmem:[#allocation8 + $0x18] sm:$0xf]
    %v235 = vld [vmem:[#allocation8 + $0x1c] sm:$0xf]
    %v236 = vld [vmem:[#allocation8 + $0x20] sm:$0xf]
    %v237 = vld [vmem:[#allocation8 + $0x24] sm:$0xf]
    %v238 = vld [vmem:[#allocation8 + $0x28] sm:$0xf]
    %v239 = vld [vmem:[#allocation8 + $0x2c] sm:$0xf]
    %v240 = vld [vmem:[#allocation8 + $0x30] sm:$0xf]
    %v241 = vld [vmem:[#allocation8 + $0x34] sm:$0xf]
    %v242 = vld [vmem:[#allocation8 + $0x38] sm:$0xf]
    %v243 = vld [vmem:[#allocation8 + $0x3c] sm:$0xf]
    %v244 = vld [vmem:[#allocation10] sm:$0x1]
    %v246 = vlaneseq
    %v247 = vshrl.u32 %v246, 7
    %v248 = vsub.s32 0, %v247
    %v249 = vrot.slane %v244, %v248
    %v267 = vunpack.c.l.b16 %v228
    %v268 = vunpack.c.l.b16 %v229
    %v269 = vunpack.c.l.b16 %v230
    %v270 = vunpack.c.l.b16 %v231
    %v271 = vunpack.c.l.b16 %v232
    %v272 = vunpack.c.l.b16 %v233
    %v273 = vunpack.c.l.b16 %v234
    %v274 = vunpack.c.l.b16 %v235
    %v275 = vunpack.c.l.b16 %v236
    %v276 = vunpack.c.l.b16 %v237
    %v277 = vunpack.c.l.b16 %v238
    %v278 = vunpack.c.l.b16 %v239
    %v279 = vunpack.c.l.b16 %v240
    %v280 = vunpack.c.l.b16 %v241
    %v281 = vunpack.c.l.b16 %v242
    %v282 = vunpack.c.l.b16 %v243
    %v283 = vpack.c.b16 %v268, %v267
    %v284 = vpack.c.b16 %v270, %v269
    %v285 = vpack.c.b16 %v272, %v271
    %v286 = vpack.c.b16 %v274, %v273
    %v287 = vpack.c.b16 %v276, %v275
    %v288 = vpack.c.b16 %v278, %v277
    %v289 = vpack.c.b16 %v280, %v279
    %v290 = vpack.c.b16 %v282, %v281
    %299 = vmatprep.subr.bf16.mxu0 0
    %300 = vmatpush1.bf16.msra.mxu0 %v283
    %301 = vmatprep.subr.bf16.mxu0 0
    %302 = vmatpush1.bf16.msra.mxu0 %v284
    %303 = vmatprep.subr.bf16.mxu0 0
    %304 = vmatpush1.bf16.msra.mxu0 %v285
    %305 = vmatprep.subr.bf16.mxu0 0
    %306 = vmatpush1.bf16.msra.mxu0 %v286
    %307 = vmatprep.subr.bf16.mxu0 0
    %308 = vmatpush1.bf16.msra.mxu0 %v287
    %309 = vmatprep.subr.bf16.mxu0 0
    %310 = vmatpush1.bf16.msra.mxu0 %v288
    %311 = vmatprep.subr.bf16.mxu0 0
    %312 = vmatpush1.bf16.msra.mxu0 %v289
    %313 = vmatprep.subr.bf16.mxu0 0
    %314 = vmatpush1.bf16.msra.mxu0 %v290
    %315 = vmatprep.subr.bf16.mxu0 0
    %316 = vmatpush1.bf16.msra.mxu0 0
    %317 = vmatprep.subr.bf16.mxu0 0
    %318 = vmatpush1.bf16.msra.mxu0 0
    %319 = vmatprep.subr.bf16.mxu0 0
    %320 = vmatpush1.bf16.msra.mxu0 0
    %321 = vmatprep.subr.bf16.mxu0 0
    %322 = vmatpush1.bf16.msra.mxu0 0
    %323 = vmatprep.subr.bf16.mxu0 0
    %324 = vmatpush1.bf16.msra.mxu0 0
    %325 = vmatprep.subr.bf16.mxu0 0
    %326 = vmatpush1.bf16.msra.mxu0 0
    %327 = vmatprep.subr.bf16.mxu0 0
    %328 = vmatpush1.bf16.msra.mxu0 0
    %329 = vmatprep.subr.bf16.mxu0 0
    %330 = vmatpush1.bf16.msra.mxu0 0
    %331 = vmatprep.mubr.bf16.mxu0 0
    %332 = vmatmul.mubr.bf16.gmra.mrb[0].mxu0 %v226
    %v333 = vpop.f32.mrb[0].mxu0
    %v334 = vadd.f32 %v249, %v333
    %v335 = vpop.f32.mrb[0].mxu0
    %v336 = vpop.f32.mrb[0].mxu0
    %v337 = vadd.f32 %v249, %v336
    %v338 = vpop.f32.mrb[0].mxu0
    %339 = vmatprep.mubr.bf16.mxu0 0
    %340 = vmatmul.mubr.bf16.gmra.mrb[0].mxu0 %v227
    %v341 = vpop.f32.mrb[0].mxu0
    %v342 = vadd.f32 %v249, %v341
    %v343 = vpop.f32.mrb[0].mxu0
    %v344 = vpop.f32.mrb[0].mxu0
    %v345 = vadd.f32 %v249, %v344
    %v346 = vpop.f32.mrb[0].mxu0
    %347 = vdwg.mxu0
    %348 = vst [vmem:[#allocation11] sm:$0xff] %v334
    %349 = vst [vmem:[#allocation11 + $0x8] sm:$0xff] %v337
    %350 = vst [vmem:[#allocation11 + $0x10] sm:$0xff] %v342
    %351 = vst [vmem:[#allocation11 + $0x18] sm:$0xff] %v345
    // Predicated region
    $region42: #{tpu_custom_call.1} parent=1 // pred_check
      _
    $region43: #{tpu_custom_call.1} parent=1 // pred_check_branch
      %353 = sbr.rel (0) target = $region45
    $region44: #{tpu_custom_call.1} parent=1 // pred_region
      %s355 = ssub.s32 512, 512
      %356 = vsyncadd [#allocation4], %s355
      %s357 = sshll.u32 [#allocation11], 4
      %s358 = int_to_ptr.vmem [resolvable:$true] %s357
      %363 = dma.vmem_to_hbm [thread:$0]  %s358, 512, %s5, [#allocation4], 128, 128, 8
    $region45: #{tpu_custom_call.1} parent=1 // pred_fallthru
      _
    // Predicated region
    $region46: #{tpu_custom_call.1} parent=1 // pred_check
      _
    $region47: #{tpu_custom_call.1} parent=1 // pred_check_branch
      %365 = sbr.rel (0) target = $region49
    $region48: #{tpu_custom_call.1} parent=1 // pred_region
      %366 = dma.done [#allocation4], 512
    $region49: #{tpu_custom_call.1} parent=1 // pred_fallthru
      _
    %367 = vsyncpa [#allocation3], 1
    %368 = vsyncpa [#allocation6], 1
    %369 = vsyncpa [#allocation9], 1
    %370 = vsyncpa [#allocation4], 1

</llo_original>
